<compile_context>
chip_gen: v5e
topology: v5e:2x2
jax: 0.10.0
libtpu: 0.0.40
codegen_flags: <defaults>
</compile_context>

<pallas_src>
import jax
import jax.numpy as jnp
from jax.experimental import pallas as pl
from jax.experimental.pallas import tpu as pltpu


def _round_up(x, m):
    return (x + m - 1) // m * m


def _make_embed_kernel(tm, pos_rows, m_axis):
    """GEMM + position-embedding epilogue.  pos block is VMEM-resident; when it
    holds more rows than one M tile we slice the right rows with pl.ds."""
    reps = pos_rows // tm

    def kernel(p_ref, w_ref, pos_ref, o_ref):
        acc = jnp.dot(p_ref[...], w_ref[...], preferred_element_type=jnp.float32)
        if reps == 1:                       # static branch: tile == pos block
            pos = pos_ref[...]
        else:                               # resident pos, in-kernel row slice
            m = pl.program_id(m_axis)
            off = pl.multiple_of((m % reps) * tm, 8)
            pos = pos_ref[pl.ds(off, tm), :]
        o_ref[...] = (acc + pos).astype(o_ref.dtype)

    return kernel


def embeddings_forward(x, conv_w, conv_b, pos_emb, patch_size, *,
                       compute_dtype=jnp.bfloat16, tm_target=512,
                       vmem_budget=48 << 20):
    """x: (B, C, H, W) NCHW.  conv_w: (hidden, C, ph, pw).  conv_b: (hidden,).
       pos_emb: (1, nP, hidden).  Returns (embeddings (B, nP, hidden), None)."""
    B, C, H, W = x.shape
    ph, pw = patch_size
    hidden = conv_w.shape[0]
    Hg, Wg = H // ph, W // pw
    nP = Hg * Wg
    K = C * ph * pw
    out_dtype = x.dtype
    cd = jnp.dtype(compute_dtype).itemsize
    ob = jnp.dtype(out_dtype).itemsize

    # --- glue: extract non-overlapping patches (conv with stride == kernel) ---
    # TODO(synk): fuse this reshape/transpose into the kernel via a strided
    #             BlockSpec over x to remove one HBM round trip.
    xc = x.astype(compute_dtype)
    patches = xc.reshape(B, C, Hg, ph, Wg, pw).transpose(0, 2, 4, 1, 3, 5)
    patches = patches.reshape(B, nP, K)

    # flattened conv weight (K, hidden), K ordered (c, i, j) to match patches
    w_mat = conv_w.reshape(hidden, K).T.astype(compute_dtype)

    # fold conv bias into f32 position embeddings (single epilogue add in-kernel)
    pos_b = (pos_emb.reshape(nP, hidden).astype(jnp.float32)
             + conv_b.astype(jnp.float32)[None, :])

    # --- MXU / lane friendly zero-padding of K and hidden ---
    Kp = _round_up(K, 128)
    Np = _round_up(hidden, 128)
    if Kp != K:
        patches = jnp.pad(patches, ((0, 0), (0, 0), (0, Kp - K)))
        w_mat = jnp.pad(w_mat, ((0, Kp - K), (0, 0)))
    if Np != hidden:
        w_mat = jnp.pad(w_mat, ((0, 0), (0, Np - hidden)))
        pos_b = jnp.pad(pos_b, ((0, 0), (0, Np - hidden)))

    # --- pad nP per sequence to a multiple of 8 (no batch-broadcast fallback) ---
    seq_pad = _round_up(nP, 8)
    if seq_pad != nP:
        patches = jnp.pad(patches, ((0, 0), (0, seq_pad - nP), (0, 0)))
        pos_b = jnp.pad(pos_b, ((0, seq_pad - nP), (0, 0)))
    M = B * seq_pad
    patches = patches.reshape(M, Kp)

    # --- choose tm (rows per grid step), batch folded into M ---
    if seq_pad >= tm_target:
        tm = 8
        for t in range(8, tm_target + 1, 8):      # largest mult-of-8 divisor <= target
            if seq_pad % t == 0:
                tm = t
        pos_rows = seq_pad
        pos_in = pos_b                            # resident, sliced in-kernel
    else:
        max_spt = max(1, tm_target // seq_pad)
        spt = 1
        for d in range(1, min(B, max_spt) + 1):   # largest divisor of B <= max_spt
            if B % d == 0:
                spt = d
        tm = spt * seq_pad                        # tile spans whole sequences
        pos_rows = tm
        pos_in = jnp.tile(pos_b, (spt, 1)) if spt > 1 else pos_b
    m_tiles = M // tm

    # --- choose tn: keep the whole weight resident (tn == Np) whenever it fits ---
    def vmem_need(tn_):
        return (2 * tm * Kp * cd            # patches tile (double-buffered)
                + 2 * Kp * tn_ * cd         # weight
                + 2 * pos_rows * tn_ * 4    # pos (+bias), f32
                + 2 * tm * tn_ * ob)        # output tile

    tn = 128
    for t in range(128, Np + 1, 128):
        if Np % t == 0 and vmem_need(t) <= vmem_budget:
            tn = t
    n_tiles = Np // tn

    # --- grid & specs ---
    if n_tiles == 1:
        # 1-D grid over M: weight + pos fetched once, resident for the whole call;
        # patches / output streamed exactly once; M shards across TensorCores.
        m_axis = 0
        grid = (m_tiles,)
        in_specs = [
            pl.BlockSpec((tm, Kp), lambda m: (m, 0)),         # patches (streamed)
            pl.BlockSpec((Kp, Np), lambda m: (0, 0)),         # weight (resident)
            pl.BlockSpec((pos_rows, Np), lambda m: (0, 0)),   # pos+bias (resident)
        ]
        out_specs = pl.BlockSpec((tm, Np), lambda m: (m, 0))
        dims = ("parallel",)
    else:
        # fallback for very large K*hidden: N outermost so each weight column tile
        # is fetched once and stays resident across the whole M sweep.
        m_axis = 1
        grid = (n_tiles, m_tiles)
        in_specs = [
            pl.BlockSpec((tm, Kp), lambda n, m: (m, 0)),
            pl.BlockSpec((Kp, tn), lambda n, m: (0, n)),
            pl.BlockSpec((pos_rows, tn), lambda n, m: (0, n)),
        ]
        out_specs = pl.BlockSpec((tm, tn), lambda n, m: (m, n))
        dims = ("arbitrary", "parallel")

    # --- cost estimate (actual DMA traffic) & tight VMEM budget ---
    flops = 2 * M * Kp * Np
    bytes_accessed = (M * Kp * cd * n_tiles     # patches (once per N tile)
                      + Kp * Np * cd            # weight (once)
                      + pos_rows * Np * 4       # pos (once)
                      + M * Np * ob)            # output
    vmem_limit = int(min(vmem_need(tn) + (8 << 20), 48 << 20))

    out = pl.pallas_call(
        _make_embed_kernel(tm, pos_rows, m_axis),
        out_shape=jax.ShapeDtypeStruct((M, Np), out_dtype),
        grid_spec=pltpu.PrefetchScalarGridSpec(
            num_scalar_prefetch=0,
            grid=grid,
            in_specs=in_specs,
            out_specs=out_specs,
        ),
        compiler_params=pltpu.CompilerParams(
            dimension_semantics=dims,
            vmem_limit_bytes=vmem_limit),
        cost_estimate=pl.CostEstimate(flops=flops, transcendentals=0,
                                      bytes_accessed=bytes_accessed),
    )(patches, w_mat, pos_in)

    out = out.reshape(B, seq_pad, Np)[:, :nP, :hidden]
    features = None  # non-hybrid path; dropout is identity in eval mode
    return out, features


if __name__ == "__main__":
    # Small shapes consistent with the module: B=2, C=4, img=16x16, patch=4x4,
    # hidden=32 -> n_patches = (16/4)*(16/4) = 16.
    key = jax.random.PRNGKey(0)
    k_x, k_w, k_b, k_p = jax.random.split(key, 4)

    B, C, H, W = 2, 4, 16, 16
    ph, pw = 4, 4
    hidden = 32
    nP = (H // ph) * (W // pw)

    x = jax.random.normal(k_x, (B, C, H, W), dtype=jnp.float32)
    conv_w = jax.random.normal(k_w, (hidden, C, ph, pw), dtype=jnp.float32) * 0.02
    conv_b = jax.random.normal(k_b, (hidden,), dtype=jnp.float32) * 0.02
    # PyTorch inits position_embeddings to zeros; use small random values so the
    # add path is exercised (still deterministic, in-script parameter init).
    pos_emb = jax.random.normal(k_p, (1, nP, hidden), dtype=jnp.float32) * 0.02

    emb, feats = embeddings_forward(x, conv_w, conv_b, pos_emb, (ph, pw))
    emb = jax.block_until_ready(emb)

    # Reference 1 (tight): same bf16 inputs, f32 accumulation -> checks kernel math.
    ref_conv_bf = jax.lax.conv_general_dilated(
        x.astype(jnp.bfloat16), conv_w.astype(jnp.bfloat16),
        window_strides=(ph, pw), padding="VALID",
        dimension_numbers=("NCHW", "OIHW", "NCHW"),
        preferred_element_type=jnp.float32)
    ref_conv_bf = ref_conv_bf + conv_b[None, :, None, None]
    ref_bf16 = ref_conv_bf.reshape(B, hidden, nP).transpose(0, 2, 1) + pos_emb

    # Reference 2 (loose): full f32 conv; bf16 inputs introduce ~1e-3 abs error.
    ref_conv32 = jax.lax.conv_general_dilated(
        x, conv_w, window_strides=(ph, pw), padding="VALID",
        dimension_numbers=("NCHW", "OIHW", "NCHW"))
    ref_conv32 = ref_conv32 + conv_b[None, :, None, None]
    ref_f32 = ref_conv32.reshape(B, hidden, nP).transpose(0, 2, 1) + pos_emb

    assert emb.shape == (B, nP, hidden)
    assert feats is None
    assert jnp.allclose(emb, ref_bf16, atol=2e-3, rtol=2e-3)
    assert jnp.allclose(emb, ref_f32, atol=3e-2, rtol=3e-2)

    print("KERNEL_OK")
</pallas_src>

<mosaic_0001>
module attributes {stable_mosaic.version = 11 : i64} {
  func.func @kernel(%arg0: i32, %arg1: memref<32x128xbf16, #tpu.memory_space<vmem>>, %arg2: memref<128x128xbf16, #tpu.memory_space<vmem>>, %arg3: memref<32x128xf32, #tpu.memory_space<vmem>>, %arg4: memref<32x128xf32, #tpu.memory_space<vmem>>) attributes {dimension_semantics = [#tpu.dimension_semantics<parallel>], iteration_bounds = array<i64: 1>, scalar_prefetch = 0 : i64, scratch_operands = 0 : i64, tpu.core_type = #tpu.core_type<tc>, window_params = [{transform_indices = @transform_0, window_bounds = array<i64: 32, 128>}, {pipeline_mode = #tpu.pipeline_mode<synchronous>, transform_indices = @transform_1, window_bounds = array<i64: 128, 128>}, {pipeline_mode = #tpu.pipeline_mode<synchronous>, transform_indices = @transform_2, window_bounds = array<i64: 32, 128>}, {transform_indices = @transform_3, window_bounds = array<i64: 32, 128>}]} {
    %c0 = arith.constant 0 : index
    %c0_0 = arith.constant 0 : index
    %0 = vector.load %arg1[%c0, %c0_0] : memref<32x128xbf16, #tpu.memory_space<vmem>>, vector<32x128xbf16>
    %c0_1 = arith.constant 0 : index
    %c0_2 = arith.constant 0 : index
    %1 = vector.load %arg2[%c0_1, %c0_2] : memref<128x128xbf16, #tpu.memory_space<vmem>>, vector<128x128xbf16>
    %cst = arith.constant dense<0.000000e+00> : vector<32x128xf32>
    %2 = tpu.matmul %0, %1, %cst {dimension_numbers = #tpu.dot_dimension_numbers<[1], [0], [0], [1], [0, 0, 1, 1], [], []>} : vector<32x128xbf16>, vector<128x128xbf16>, vector<32x128xf32> -> vector<32x128xf32>
    %c0_3 = arith.constant 0 : index
    %c0_4 = arith.constant 0 : index
    %3 = vector.load %arg3[%c0_3, %c0_4] : memref<32x128xf32, #tpu.memory_space<vmem>>, vector<32x128xf32>
    %4 = arith.addf %2, %3 : vector<32x128xf32>
    %c0_5 = arith.constant 0 : index
    %c0_6 = arith.constant 0 : index
    %5 = vector.load %arg4[%c0_5, %c0_6] : memref<32x128xf32, #tpu.memory_space<vmem>>, vector<32x128xf32>
    tpu.vector_store %arg4[%c0_5, %c0_6], %4 {strides = array<i32>} : memref<32x128xf32, #tpu.memory_space<vmem>>, vector<32x128xf32>,
    return
  }
  func.func @transform_0(%arg0: i32) -> (i32, i32) {
    %c0_i32 = arith.constant 0 : i32
    %c0_i32_0 = arith.constant 0 : i32
    return %arg0, %c0_i32 : i32, i32
  }
  func.func @transform_1(%arg0: i32) -> (i32, i32) {
    %c0_i32 = arith.constant 0 : i32
    %c0_i32_0 = arith.constant 0 : i32
    %c0_i32_1 = arith.constant 0 : i32
    return %c0_i32, %c0_i32_0 : i32, i32
  }
  func.func @transform_2(%arg0: i32) -> (i32, i32) {
    %c0_i32 = arith.constant 0 : i32
    %c0_i32_0 = arith.constant 0 : i32
    %c0_i32_1 = arith.constant 0 : i32
    return %c0_i32, %c0_i32_0 : i32, i32
  }
  func.func @transform_3(%arg0: i32) -> (i32, i32) {
    %c0_i32 = arith.constant 0 : i32
    %c0_i32_0 = arith.constant 0 : i32
    return %arg0, %c0_i32 : i32, i32
  }
}

</mosaic_0001>

<llo_original>
// kernel: tpu_custom_call.1
$region0: #{tpu_custom_call.1}
  #allocation0 [shape = 'u32[]', space=smem, size = 0x4, offset = 0x4, fixed_abs, tag = 'smem constant byte address 0x4 - core index']
  #allocation1 [shape = 'u32[72,128]{1,0:T(1,128)}', space=vmem, size = 0x9000, scoped, tag = 'internal scratch']
  %s0 = inlined_call_operand.hbm [shape: bf16[32,128], index: 0, kind: input, shape index: {}]
  %s1 = inlined_call_operand.hbm [shape: bf16[128,128], index: 1, kind: input, shape index: {}]
  %s2 = inlined_call_operand.hbm [shape: f32[32,128], index: 2, kind: input, shape index: {}]
  %s3 = inlined_call_operand.hbm [shape: f32[32,128], index: 3, kind: output, shape index: {}]
  %s4 = sld [smem:[#allocation0]]
  $region34: #{tpu_custom_call.1} parent=0
    _
  %s6 = ssub.s32 1, %s4
  %s7 = scalar_select 0, %s6, %s4
  $region1: #{tpu_custom_call.1} parent=0
    #allocation2 [shape = 'u8[8192]{0}', space=vmem, size = 0x2000, scoped, tag = 'input window, operand 0, single buffered']
    #allocation3 [shape = 's32[1]{0}', space=sflag, size = 0x4, scoped, tag = 'scoped memory for tpu_custom_call.1']
    #allocation4 [shape = 's32[1]{0}', space=sflag, size = 0x4, scoped, tag = 'scoped memory for tpu_custom_call.1']
    #allocation5 [shape = 'u8[32768]{0}', space=vmem, size = 0x8000, scoped, tag = 'input window, operand 1, single buffered']
    #allocation6 [shape = 's32[1]{0}', space=sflag, size = 0x4, scoped, tag = 'scoped memory for tpu_custom_call.1']
    #allocation7 [shape = 'u8[16384]{0}', space=vmem, size = 0x4000, scoped, tag = 'input window, operand 2, single buffered']
    #allocation8 [shape = 'u8[16384]{0}', space=vmem, size = 0x4000, scoped, tag = 'output window, operand 0, single buffered']
    %8 = vsyncpa [#allocation3], 0
    %9 = vsyncpa [#allocation6], 0
    %10 = vsyncpa [#allocation4], 0
    // Predicated region
    $region2: #{tpu_custom_call.1} parent=1 // pred_check
      _
    $region3: #{tpu_custom_call.1} parent=1 // pred_check_branch
      %12 = sbr.rel (0) target = $region5
    $region4: #{tpu_custom_call.1} parent=1 // pred_region
      %14 = vsyncadd [#allocation3], 0
      %s15 = sshll.u32 %s0, 4
      %s16 = int_to_ptr.hbm [resolvable:$true] %s15
      %s17 = sshll.u32 [#allocation2], 4
      %s18 = int_to_ptr.vmem [resolvable:$true] %s17
      %23 = dma.hbm_to_vmem [thread:$0]  %s16, 256, %s18, [#allocation3], 64, 64, 4
    $region5: #{tpu_custom_call.1} parent=1 // pred_fallthru
      _
    // Predicated region
    $region6: #{tpu_custom_call.1} parent=1 // pred_check
      _
    $region7: #{tpu_custom_call.1} parent=1 // pred_check_branch
      %25 = sbr.rel (0) target = $region9
    $region8: #{tpu_custom_call.1} parent=1 // pred_region
      %27 = vsyncadd [#allocation6], 0
      %s28 = sshll.u32 %s1, 4
      %s29 = int_to_ptr.hbm [resolvable:$true] %s28
      %s30 = sshll.u32 [#allocation5], 4
      %s31 = int_to_ptr.vmem [resolvable:$true] %s30
      %36 = dma.hbm_to_vmem [thread:$0]  %s29, 1024, %s31, [#allocation6], 64, 64, 4
    $region9: #{tpu_custom_call.1} parent=1 // pred_fallthru
      _
    // Predicated region
    $region10: #{tpu_custom_call.1} parent=1 // pred_check
      _
    $region11: #{tpu_custom_call.1} parent=1 // pred_check_branch
      %38 = sbr.rel (0) target = $region13
    $region12: #{tpu_custom_call.1} parent=1 // pred_region
      %40 = vsyncadd [#allocation6], 0
      %s41 = sshll.u32 %s2, 4
      %s42 = int_to_ptr.hbm [resolvable:$true] %s41
      %s43 = sshll.u32 [#allocation7], 4
      %s44 = int_to_ptr.vmem [resolvable:$true] %s43
      %49 = dma.hbm_to_vmem [thread:$0]  %s42, 512, %s44, [#allocation6], 128, 128, 8
    $region13: #{tpu_custom_call.1} parent=1 // pred_fallthru
      _
    // Predicated region
    $region14: #{tpu_custom_call.1} parent=1 // pred_check
      _
    $region15: #{tpu_custom_call.1} parent=1 // pred_check_branch
      %51 = sbr.rel (0) target = $region17
    $region16: #{tpu_custom_call.1} parent=1 // pred_region
      %53 = dma.done [#allocation3], 256
    $region17: #{tpu_custom_call.1} parent=1 // pred_fallthru
      _
    // Predicated region
    $region18: #{tpu_custom_call.1} parent=1 // pred_check
      _
    $region19: #{tpu_custom_call.1} parent=1 // pred_check_branch
      %55 = sbr.rel (0) target = $region21
    $region20: #{tpu_custom_call.1} parent=1 // pred_region
      %57 = dma.done [#allocation6], 1024
    $region21: #{tpu_custom_call.1} parent=1 // pred_fallthru
      _
    // Predicated region
    $region22: #{tpu_custom_call.1} parent=1 // pred_check
      _
    $region23: #{tpu_custom_call.1} parent=1 // pred_check_branch
      %59 = sbr.rel (0) target = $region25
    $region24: #{tpu_custom_call.1} parent=1 // pred_region
      %61 = dma.done [#allocation6], 512
    $region25: #{tpu_custom_call.1} parent=1 // pred_fallthru
      _
    %v62 = vld [vmem:[#allocation2] sm:$0xf]
    %v63 = vld [vmem:[#allocation2 + $0x4] sm:$0xf]
    %v64 = vld [vmem:[#allocation2 + $0x8] sm:$0xf]
    %v65 = vld [vmem:[#allocation2 + $0xc] sm:$0xf]
    %v66 = vld [vmem:[#allocation5] sm:$0xf]
    %v67 = vld [vmem:[#allocation5 + $0x4] sm:$0xf]
    %v68 = vld [vmem:[#allocation5 + $0x8] sm:$0xf]
    %v69 = vld [vmem:[#allocation5 + $0xc] sm:$0xf]
    %v70 = vld [vmem:[#allocation5 + $0x10] sm:$0xf]
    %v71 = vld [vmem:[#allocation5 + $0x14] sm:$0xf]
    %v72 = vld [vmem:[#allocation5 + $0x18] sm:$0xf]
    %v73 = vld [vmem:[#allocation5 + $0x1c] sm:$0xf]
    %v74 = vld [vmem:[#allocation5 + $0x20] sm:$0xf]
    %v75 = vld [vmem:[#allocation5 + $0x24] sm:$0xf]
    %v76 = vld [vmem:[#allocation5 + $0x28] sm:$0xf]
    %v77 = vld [vmem:[#allocation5 + $0x2c] sm:$0xf]
    %v78 = vld [vmem:[#allocation5 + $0x30] sm:$0xf]
    %v79 = vld [vmem:[#allocation5 + $0x34] sm:$0xf]
    %v80 = vld [vmem:[#allocation5 + $0x38] sm:$0xf]
    %v81 = vld [vmem:[#allocation5 + $0x3c] sm:$0xf]
    %v82 = vld [vmem:[#allocation7] sm:$0xff]
    %v83 = vld [vmem:[#allocation7 + $0x8] sm:$0xff]
    %v84 = vld [vmem:[#allocation7 + $0x10] sm:$0xff]
    %v85 = vld [vmem:[#allocation7 + $0x18] sm:$0xff]
    %v90 = vunpack.c.l.b16 %v62
    %v91 = vunpack.c.l.b16 %v63
    %v92 = vunpack.c.l.b16 %v64
    %v93 = vunpack.c.l.b16 %v65
    %v94 = vpack.c.b16 %v91, %v90
    %v95 = vpack.c.b16 %v93, %v92
    %v114 = vunpack.c.l.b16 %v66
    %v115 = vunpack.c.l.b16 %v67
    %v116 = vunpack.c.l.b16 %v68
    %v117 = vunpack.c.l.b16 %v69
    %v118 = vunpack.c.l.b16 %v70
    %v119 = vunpack.c.l.b16 %v71
    %v120 = vunpack.c.l.b16 %v72
    %v121 = vunpack.c.l.b16 %v73
    %v122 = vunpack.c.l.b16 %v74
    %v123 = vunpack.c.l.b16 %v75
    %v124 = vunpack.c.l.b16 %v76
    %v125 = vunpack.c.l.b16 %v77
    %v126 = vunpack.c.l.b16 %v78
    %v127 = vunpack.c.l.b16 %v79
    %v128 = vunpack.c.l.b16 %v80
    %v129 = vunpack.c.l.b16 %v81
    %v130 = vpack.c.b16 %v115, %v114
    %v131 = vpack.c.b16 %v117, %v116
    %v132 = vpack.c.b16 %v119, %v118
    %v133 = vpack.c.b16 %v121, %v120
    %v134 = vpack.c.b16 %v123, %v122
    %v135 = vpack.c.b16 %v125, %v124
    %v136 = vpack.c.b16 %v127, %v126
    %v137 = vpack.c.b16 %v129, %v128
    %146 = vmatpush.bf16.msra.mxu0 %v137
    %147 = vmatpush.bf16.msra.mxu0 %v136
    %148 = vmatpush.bf16.msra.mxu0 %v135
    %149 = vmatpush.bf16.msra.mxu0 %v134
    %150 = vmatpush.bf16.msra.mxu0 %v133
    %151 = vmatpush.bf16.msra.mxu0 %v132
    %152 = vmatpush.bf16.msra.mxu0 %v131
    %153 = vmatpush.bf16.msra.mxu0 %v130
    %154 = vmatmul.bf16.gmra.mxu0 %v94
    %v155 = vpop.f32.mrf.mxu0
    %v156 = vadd.f32 %v82, %v155
    %v157 = vpop.f32.mrf.mxu0
    %v158 = vadd.f32 %v83, %v157
    %159 = vmatmul.bf16.gmra.mxu0 %v95
    %v160 = vpop.f32.mrf.mxu0
    %v161 = vadd.f32 %v84, %v160
    %v162 = vpop.f32.mrf.mxu0
    %v163 = vadd.f32 %v85, %v162
    %164 = vdwg.mxu0
    %165 = vst [vmem:[#allocation8] sm:$0xff] %v156
    %166 = vst [vmem:[#allocation8 + $0x8] sm:$0xff] %v158
    %167 = vst [vmem:[#allocation8 + $0x10] sm:$0xff] %v161
    %168 = vst [vmem:[#allocation8 + $0x18] sm:$0xff] %v163
    // Predicated region
    $region26: #{tpu_custom_call.1} parent=1 // pred_check
      _
    $region27: #{tpu_custom_call.1} parent=1 // pred_check_branch
      %170 = sbr.rel (0) target = $region29
    $region28: #{tpu_custom_call.1} parent=1 // pred_region
      %172 = vsyncadd [#allocation4], 0
      %s173 = sshll.u32 [#allocation8], 4
      %s174 = int_to_ptr.vmem [resolvable:$true] %s173
      %s175 = sshll.u32 %s3, 4
      %s176 = int_to_ptr.hbm [resolvable:$true] %s175
      %181 = dma.vmem_to_hbm [thread:$0]  %s174, 512, %s176, [#allocation4], 128, 128, 8
    $region29: #{tpu_custom_call.1} parent=1 // pred_fallthru
      _
    // Predicated region
    $region30: #{tpu_custom_call.1} parent=1 // pred_check
      _
    $region31: #{tpu_custom_call.1} parent=1 // pred_check_branch
      %183 = sbr.rel (0) target = $region33
    $region32: #{tpu_custom_call.1} parent=1 // pred_region
      %185 = dma.done [#allocation4], 512
    $region33: #{tpu_custom_call.1} parent=1 // pred_fallthru
      _
    %186 = vsyncpa [#allocation3], 1
    %187 = vsyncpa [#allocation6], 1
    %188 = vsyncpa [#allocation4], 1

</llo_original>
